<compile_context>
chip_gen: v7x
topology: tpu7x:2x2x1
jax: 0.10.0
libtpu: 0.0.40
codegen_flags: <defaults>
</compile_context>

<pallas_src>
import math

import jax
import jax.numpy as jnp
from jax.experimental import pallas as pl
from jax.experimental.pallas import tpu as pltpu


def _round_up(x, m):
    return ((x + m - 1) // m) * m


def _cdiv(a, b):
    return (a + b - 1) // b


def _default_vmem_limit_bytes():
    """Per-chip scoped-VMEM request: leave headroom for Mosaic scratch."""
    cap = None
    try:
        cap = getattr(pltpu.get_tpu_info(), "vmem_capacity_bytes", None)
    except Exception:
        cap = None
    if cap is None or cap <= 0:
        return 48 * 1024 * 1024                       # safe on every chip
    if cap <= 64 * 1024 * 1024:                       # v7x: 64 MiB per TC
        return 48 * 1024 * 1024
    return min(cap - 16 * 1024 * 1024, 112 * 1024 * 1024)  # v5e / v6e


def _siren_kernel(x_ref, w_ref, b_ref, o_ref):
    # MXU matmul with f32 accumulation; bias add + sine stay f32 (w0 is
    # already folded into W and b by the wrapper).
    y = jnp.dot(x_ref[...], w_ref[...], preferred_element_type=jnp.float32)
    y = y + b_ref[...]                                 # (TM, TN) + (1, TN)
    o_ref[...] = jnp.sin(y).astype(o_ref.dtype)


def siren_layer(x, w_t, b, *, w0=1.0, is_first=False, compute_dtype="auto",
                out_dtype=None, block_rows=None, block_cols=None,
                vmem_limit_bytes=None):
    """SIREN layer forward: sin(w0 * (x @ w_t + b)).

    x:   (B, D_in)
    w_t: (D_in, H)  -- transpose of the PyTorch nn.Linear weight
    b:   (H,) or (1, H)
    compute_dtype: streaming dtype for x / w_t. "auto" -> bf16 for hidden
      layers, f32 for the first layer (large w0 amplifies bf16 input error).
    out_dtype: output dtype (default: x.dtype). bf16 halves writeback traffic.
    """
    B, D_in = x.shape
    D_w, H = w_t.shape
    assert D_w == D_in, "weight must be (input_dim, hidden_dim)"

    if out_dtype is None:
        out_dtype = x.dtype
    if compute_dtype == "auto":
        compute_dtype = jnp.float32 if is_first else jnp.bfloat16
    stream_dtype = jnp.dtype(compute_dtype)

    x_is = stream_dtype.itemsize
    w_is = stream_dtype.itemsize
    o_is = jnp.dtype(out_dtype).itemsize

    if vmem_limit_bytes is None:
        vmem_limit_bytes = _default_vmem_limit_bytes()

    # VMEM footprints use lane/sublane padded dims (layout padding only — the
    # HBM arrays themselves are NOT padded / copied).
    sub = 8 * max(1, 4 // x_is)                # 8 (f32) / 16 (bf16) sublanes
    d_sub = _round_up(D_in, sub)
    d_lane = _round_up(D_in, 128)
    budget = max(int(vmem_limit_bytes) - (2 << 20), 4 << 20)

    def resident_bytes(tn):
        tn_lane = _round_up(tn, 128)
        # W and bias are double-buffered by the pipeline even with a constant
        # block index -> count them 2x.
        return 2 * (d_sub * tn_lane * w_is + tn_lane * 4)

    def streamed_bytes(tm, tn):
        tn_lane = _round_up(tn, 128)
        return 2 * tm * (d_lane * x_is + tn_lane * o_is)

    # --- TN (H tile): full H unless the double-buffered W overflows (v7x) ---
    if block_cols is not None:
        TN = int(block_cols)
    else:
        TN = H
        if resident_bytes(TN) + streamed_bytes(sub, TN) > budget:
            tn = _round_up(H, 128)
            while tn > 128 and resident_bytes(tn) + streamed_bytes(sub, tn) > budget:
                tn = _round_up(tn // 2, 128)
            TN = min(tn, H)

    # --- TM (batch tile) from the remaining VMEM budget ---
    if block_rows is not None:
        TM = int(block_rows)
    else:
        per_row = 2 * (d_lane * x_is + _round_up(TN, 128) * o_is)
        avail = max(budget - resident_bytes(TN), per_row * sub)
        tm = max(sub, avail // per_row)
        tm = min(tm, 2048)
        tm = min(tm, _round_up(_cdiv(B, 2), sub))   # >=2 batch steps (v7x 2 TCs)
        tm = min(tm, _round_up(B, sub))
        tm = _round_up(int(tm), sub)
        if tm >= 128:
            tm = (tm // 128) * 128                  # MXU-aligned rows
        TM = tm

    # Fold w0 into W and b (saves a per-output-element VPU multiply).
    wp = (w_t.astype(jnp.float32) * jnp.float32(w0)).astype(stream_dtype)
    bp = (jnp.asarray(b, jnp.float32) * jnp.float32(w0)).reshape(1, H)
    xs = x if x.dtype == stream_dtype else x.astype(stream_dtype)

    grid = (pl.cdiv(B, TM), pl.cdiv(H, TN))

    cost = pl.CostEstimate(
        flops=2 * B * D_in * H,
        transcendentals=B * H,
        bytes_accessed=(B * D_in * x_is + D_in * H * w_is + H * 4
                        + B * H * o_is),
    )

    return pl.pallas_call(
        _siren_kernel,
        out_shape=jax.ShapeDtypeStruct((B, H), out_dtype),
        grid_spec=pl.GridSpec(
            grid=grid,
            in_specs=[
                pl.BlockSpec((TM, D_in), lambda i, j: (i, 0)),   # streamed x
                pl.BlockSpec((D_in, TN), lambda i, j: (0, j)),   # resident W
                pl.BlockSpec((1, TN), lambda i, j: (0, j)),      # resident b
            ],
            out_specs=pl.BlockSpec((TM, TN), lambda i, j: (i, j)),
        ),
        compiler_params=pltpu.CompilerParams(
            dimension_semantics=("parallel", "parallel"),
            vmem_limit_bytes=int(vmem_limit_bytes),
        ),
        cost_estimate=cost,
    )(xs, wp, bp)


def init_siren_params(key, input_dim, hidden_dim, *, w0=1.0, c=6.0,
                      is_first=False, use_bias=True):
    """Deterministic SIREN init matching SirenLayer.reset_parameters()."""
    w_std = (1.0 / input_dim) if is_first else math.sqrt(c / input_dim) / w0
    kw, kb = jax.random.split(key)
    # PyTorch Linear weight is (hidden, input); we store its transpose.
    weight = jax.random.uniform(kw, (hidden_dim, input_dim), jnp.float32,
                                minval=-w_std, maxval=w_std)
    w_t = weight.T  # (input_dim, hidden_dim)
    if use_bias:
        bias = jax.random.uniform(kb, (hidden_dim,), jnp.float32,
                                  minval=-w_std, maxval=w_std)
    else:
        bias = jnp.zeros((hidden_dim,), jnp.float32)
    return w_t, bias.reshape(1, hidden_dim)


def _siren_ref(x, w_t, b, w0):
    y = jnp.dot(x, w_t, precision=jax.lax.Precision.HIGHEST)
    return jnp.sin(w0 * (y + jnp.asarray(b, jnp.float32).reshape(1, -1)))


if __name__ == "__main__":
    key = jax.random.PRNGKey(0)
    k_x, k_p1, k_p2 = jax.random.split(key, 3)

    batch, input_dim, hidden_dim = 16, 16, 32
    x = jax.random.normal(k_x, (batch, input_dim), jnp.float32)

    # --- Case 1: hidden layer, w0=1.0, explicit f32 streaming (tight check) ---
    w0 = 1.0
    w_t, b = init_siren_params(k_p1, input_dim, hidden_dim,
                               w0=w0, is_first=False, use_bias=True)
    ref = _siren_ref(x, w_t, b, w0)
    out = jax.block_until_ready(
        siren_layer(x, w_t, b, w0=w0, compute_dtype=jnp.float32))
    assert out.shape == (batch, hidden_dim) and out.dtype == jnp.float32
    assert jnp.allclose(out, ref, atol=1e-4, rtol=1e-4)

    # --- Case 2: first layer, w0=30.0 -> auto policy keeps f32 streaming ---
    w0_first = 30.0
    w_t1, b1 = init_siren_params(k_p2, input_dim, hidden_dim,
                                 w0=w0_first, is_first=True, use_bias=True)
    ref1 = _siren_ref(x, w_t1, b1, w0_first)
    out1 = jax.block_until_ready(
        siren_layer(x, w_t1, b1, w0=w0_first, is_first=True))
    assert jnp.allclose(out1, ref1, atol=2e-3, rtol=2e-3)

    # --- Case 3: hidden-layer default = bf16 streaming (HBM/MXU optimization) ---
    out_bf = jax.block_until_ready(siren_layer(x, w_t, b, w0=w0))
    assert out_bf.dtype == jnp.float32
    assert jnp.allclose(out_bf, ref, atol=3e-2, rtol=3e-2)

    # --- Case 4: ragged batch (B not a multiple of the tile) + bf16 output ---
    xr = jax.random.normal(k_x, (10, input_dim), jnp.float32)
    refr = _siren_ref(xr, w_t, b, w0)
    outr = jax.block_until_ready(
        siren_layer(xr, w_t, b, w0=w0, compute_dtype=jnp.float32,
                    out_dtype=jnp.bfloat16))
    assert outr.shape == (10, hidden_dim) and outr.dtype == jnp.bfloat16
    assert jnp.allclose(outr.astype(jnp.float32), refr, atol=2e-2, rtol=2e-2)

    print("KERNEL_OK")
</pallas_src>

<mosaic_0001>
module attributes {stable_mosaic.version = 11 : i64} {
  func.func @_siren_kernel(%arg0: i32, %arg1: i32, %arg2: memref<8x16xf32, #tpu.memory_space<vmem>>, %arg3: memref<16x32xf32, #tpu.memory_space<vmem>>, %arg4: memref<1x32xf32, #tpu.memory_space<vmem>>, %arg5: memref<8x32xf32, #tpu.memory_space<vmem>>) attributes {dimension_semantics = [#tpu.dimension_semantics<parallel>, #tpu.dimension_semantics<parallel>], iteration_bounds = array<i64: 2, 1>, scalar_prefetch = 0 : i64, scratch_operands = 0 : i64, tpu.core_type = #tpu.core_type<tc>, window_params = [{transform_indices = @transform_0, window_bounds = array<i64: 8, 16>}, {transform_indices = @transform_1, window_bounds = array<i64: 16, 32>}, {transform_indices = @transform_2, window_bounds = array<i64: 1, 32>}, {transform_indices = @transform_3, window_bounds = array<i64: 8, 32>}]} {
    %c0 = arith.constant 0 : index
    %c0_0 = arith.constant 0 : index
    %0 = vector.load %arg2[%c0, %c0_0] : memref<8x16xf32, #tpu.memory_space<vmem>>, vector<8x16xf32>
    %c0_1 = arith.constant 0 : index
    %c0_2 = arith.constant 0 : index
    %1 = vector.load %arg3[%c0_1, %c0_2] : memref<16x32xf32, #tpu.memory_space<vmem>>, vector<16x32xf32>
    %cst = arith.constant dense<0.000000e+00> : vector<8x32xf32>
    %2 = tpu.matmul %0, %1, %cst {dimension_numbers = #tpu.dot_dimension_numbers<[1], [0], [0], [1], [0, 0, 1, 1], [], []>} : vector<8x16xf32>, vector<16x32xf32>, vector<8x32xf32> -> vector<8x32xf32>
    %c0_3 = arith.constant 0 : index
    %c0_4 = arith.constant 0 : index
    %3 = vector.load %arg4[%c0_3, %c0_4] : memref<1x32xf32, #tpu.memory_space<vmem>>, vector<1x32xf32>
    %4 = vector.broadcast %3 : vector<1x32xf32> to vector<8x32xf32>
    %5 = arith.addf %2, %4 : vector<8x32xf32>
    %6 = math.sin %5 : vector<8x32xf32>
    %c0_5 = arith.constant 0 : index
    %c0_6 = arith.constant 0 : index
    %7 = vector.load %arg5[%c0_5, %c0_6] : memref<8x32xf32, #tpu.memory_space<vmem>>, vector<8x32xf32>
    tpu.vector_store %arg5[%c0_5, %c0_6], %6 {strides = array<i32>} : memref<8x32xf32, #tpu.memory_space<vmem>>, vector<8x32xf32>,
    return
  }
  func.func @transform_0(%arg0: i32, %arg1: i32) -> (i32, i32) {
    %c0_i32 = arith.constant 0 : i32
    %c0_i32_0 = arith.constant 0 : i32
    return %arg0, %c0_i32 : i32, i32
  }
  func.func @transform_1(%arg0: i32, %arg1: i32) -> (i32, i32) {
    %c0_i32 = arith.constant 0 : i32
    %c0_i32_0 = arith.constant 0 : i32
    return %c0_i32, %arg1 : i32, i32
  }
  func.func @transform_2(%arg0: i32, %arg1: i32) -> (i32, i32) {
    %c0_i32 = arith.constant 0 : i32
    %c0_i32_0 = arith.constant 0 : i32
    return %c0_i32, %arg1 : i32, i32
  }
  func.func @transform_3(%arg0: i32, %arg1: i32) -> (i32, i32) {
    %c0_i32 = arith.constant 0 : i32
    return %arg0, %arg1 : i32, i32
  }
}

</mosaic_0001>

<llo_original>
// kernel: tpu_custom_call.1
$region0: #{tpu_custom_call.1}
  #allocation0 [shape = 'u32[]', space=smem, size = 0x4, offset = 0x4, fixed_abs, tag = 'smem constant byte address 0x4 - core index']
  #allocation1 [shape = 'u32[144,128]{1,0:T(1,128)}', space=vmem, size = 0x12000, scoped, tag = 'internal scratch']
  %s0 = inlined_call_operand.hbm [shape: f32[16,16], index: 0, kind: input, shape index: {}]
  %s1 = inlined_call_operand.hbm [shape: f32[16,32], index: 1, kind: input, shape index: {}]
  %s2 = inlined_call_operand.vmem [shape: f32[1,32], index: 2, kind: input, shape index: {}]
  %s3 = inlined_call_operand.hbm [shape: f32[16,32], index: 3, kind: output, shape index: {}]
  %s4 = sld [smem:[#allocation0]]
  $region53: #{tpu_custom_call.1} parent=0
    _
  %s6 = ssub.s32 1, %s4
  %s7 = scalar_select 0, %s6, %s4
  $region1: #{tpu_custom_call.1} parent=0
    #allocation2 [shape = 'u8[8192]{0}', space=vmem, size = 0x2000, scoped, tag = 'input window, operand 0']
    #allocation3 [shape = 's32[2]{0}', space=sflag, size = 0x8, scoped, tag = 'scoped memory for tpu_custom_call.1']
    #allocation4 [shape = 's32[2]{0}', space=sflag, size = 0x8, scoped, tag = 'scoped memory for tpu_custom_call.1']
    #allocation5 [shape = 'u8[8192]{0}', space=vmem, size = 0x2000, scoped, tag = 'input window, operand 1, single buffered']
    #allocation6 [shape = 's32[1]{0}', space=sflag, size = 0x4, scoped, tag = 'scoped memory for tpu_custom_call.1']
    #allocation7 [shape = 'u8[8192]{0}', space=vmem, size = 0x2000, scoped, tag = 'output window, operand 0']
    %8 = vsyncpa [#allocation3], 0
    %s9 = scalar_lea.sflag [#allocation3], 1
    %10 = vsyncpa %s9, 0
    %11 = vsyncpa [#allocation6], 0
    %12 = vsyncpa [#allocation4], 0
    %s13 = scalar_lea.sflag [#allocation4], 1
    %14 = vsyncpa %s13, 0
    loop: start=0, step=1, limit=4
    $region2: #{tpu_custom_call.1} parent=1 // loop_pre_header
      _
    $region3: #{tpu_custom_call.1} parent=1 // loop_header
      %s16 = sphi 0, %s20
      %p17 = scmp.ge.s32.totalorder %s16, 4
      %s23 = sphi 0, %s35
      %s24 = sphi 0, %s31
      %s25 = sphi 0, %s23
      %s26 = sphi 0, %s24
      %s27 = sphi 0, %s25
      %s28 = sphi 0, %s26
      %s38 = sphi 0, %s40
      %s41 = sphi 0, %s38
      %s42 = sphi 0, %s41
      %s58 = sphi 0, %s42
      %s64 = sphi 0, %s66
      %s67 = sphi 0, %s64
      %s68 = sphi 0, %s67
      %s84 = sphi 0, %s68
      %s90 = sphi 0, %s92
      %s93 = sphi 0, %s90
      %s94 = sphi 0, %s93
      %s110 = sphi 0, %s94
      %s118 = sphi 0, %s120
      %s121 = sphi 0, %s118
      %s122 = sphi 0, %s121
      %s138 = sphi 0, %s122
    $region4: #{tpu_custom_call.1} parent=1 // loop_header_branch
      %19 = sbr.rel (%p17) target = $region8
    $region5: #{tpu_custom_call.1} parent=1 // loop_body
      %s21 = ssub.s32 %s16, 1
      %s22 = ssub.s32 %s16, 2
      %s29 = sadd.s32 1, %s24
      %p30 = scmp.ge.s32.totalorder %s29, 1
      %s31 = scalar_select %p30, 0, %s29
      %s32 = sadd.s32 1, %s23
      %s33 = scalar_select %p30, %s32, %s23
      %p34 = scmp.ge.s32.totalorder %s33, 2
      %s35 = scalar_select %p34, 0, %s33
      %s36 = ssub.s32 %s23, %s35
      %p37 = scmp.eq.s32.totalorder %s36, 0
      %s39 = sadd.s32 %s38, 1
      %s40 = scalar_select %p37, %s38, %s39
      %p43 = pneg %p37
      %p44 = scmp.eq.s32.totalorder %s16, 1
      %p45 = por %p43, %p44
      %p46 = scmp.ne.s32.totalorder %s38, %s41
      %p47 = scmp.eq.s32.totalorder %s16, 0
      %p48 = por %p46, %p47
      %p49 = scmp.ne.s32.totalorder %s38, %s41
      %p50 = scmp.eq.s32.totalorder %s21, 1
      %p51 = por %p49, %p50
      %p52 = scmp.ne.s32.totalorder %s41, %s42
      %p53 = scmp.eq.s32.totalorder %s21, 0
      %p54 = por %p52, %p53
      %p55 = scmp.ne.s32.totalorder %s41, %s42
      %p56 = scmp.eq.s32.totalorder %s22, 1
      %p57 = por %p55, %p56
      %p59 = scmp.ne.s32.totalorder %s42, %s58
      %p60 = scmp.eq.s32.totalorder %s22, 0
      %p61 = por %p59, %p60
      %s62 = ssub.s32 %s24, %s31
      %p63 = scmp.eq.s32.totalorder %s62, 0
      %s65 = sadd.s32 %s64, 1
      %s66 = scalar_select %p63, %s64, %s65
      %p69 = pneg %p63
      %p70 = scmp.eq.s32.totalorder %s16, 1
      %p71 = por %p69, %p70
      %p72 = scmp.ne.s32.totalorder %s64, %s67
      %p73 = scmp.eq.s32.totalorder %s16, 0
      %p74 = por %p72, %p73
      %p75 = scmp.ne.s32.totalorder %s64, %s67
      %p76 = scmp.eq.s32.totalorder %s21, 1
      %p77 = por %p75, %p76
      %p78 = scmp.ne.s32.totalorder %s67, %s68
      %p79 = scmp.eq.s32.totalorder %s21, 0
      %p80 = por %p78, %p79
      %p81 = scmp.ne.s32.totalorder %s67, %s68
      %p82 = scmp.eq.s32.totalorder %s22, 1
      %p83 = por %p81, %p82
      %p85 = scmp.ne.s32.totalorder %s68, %s84
      %p86 = scmp.eq.s32.totalorder %s22, 0
      %p87 = por %p85, %p86
      %s88 = ssub.s32 %s24, %s31
      %p89 = scmp.eq.s32.totalorder %s88, 0
      %s91 = sadd.s32 %s90, 1
      %s92 = scalar_select %p89, %s90, %s91
      %p95 = pneg %p89
      %p96 = scmp.eq.s32.totalorder %s16, 1
      %p97 = por %p95, %p96
      %p98 = scmp.ne.s32.totalorder %s90, %s93
      %p99 = scmp.eq.s32.totalorder %s16, 0
      %p100 = por %p98, %p99
      %p101 = scmp.ne.s32.totalorder %s90, %s93
      %p102 = scmp.eq.s32.totalorder %s21, 1
      %p103 = por %p101, %p102
      %p104 = scmp.ne.s32.totalorder %s93, %s94
      %p105 = scmp.eq.s32.totalorder %s21, 0
      %p106 = por %p104, %p105
      %p107 = scmp.ne.s32.totalorder %s93, %s94
      %p108 = scmp.eq.s32.totalorder %s22, 1
      %p109 = por %p107, %p108
      %p111 = scmp.ne.s32.totalorder %s94, %s110
      %p112 = scmp.eq.s32.totalorder %s22, 0
      %p113 = por %p111, %p112
      %s114 = ssub.s32 %s23, %s35
      %s115 = ssub.s32 %s24, %s31
      %s116 = sor.u32 %s114, %s115
      %p117 = scmp.eq.s32.totalorder %s116, 0
      %s119 = sadd.s32 %s118, 1
      %s120 = scalar_select %p117, %s118, %s119
      %p123 = pneg %p117
      %p124 = scmp.eq.s32.totalorder %s16, 1
      %p125 = por %p123, %p124
      %p126 = scmp.ne.s32.totalorder %s118, %s121
      %p127 = scmp.eq.s32.totalorder %s16, 0
      %p128 = por %p126, %p127
      %p129 = scmp.ne.s32.totalorder %s118, %s121
      %p130 = scmp.eq.s32.totalorder %s21, 1
      %p131 = por %p129, %p130
      %p132 = scmp.ne.s32.totalorder %s121, %s122
      %p133 = scmp.eq.s32.totalorder %s21, 0
      %p134 = por %p132, %p133
      %p135 = scmp.ne.s32.totalorder %s121, %s122
      %p136 = scmp.eq.s32.totalorder %s22, 1
      %p137 = por %p135, %p136
      %p139 = scmp.ne.s32.totalorder %s122, %s138
      %p140 = scmp.eq.s32.totalorder %s22, 0
      %p141 = por %p139, %p140
      %p142 = scmp.le.s32.totalorder 1, %s16
      %p143 = scmp.lt.s32.totalorder %s16, 3
      %p144 = pnand %p142, %p143
      %p145 = pneg %p144
      // Predicated region
      $region9: #{tpu_custom_call.1} parent=5 // pred_check
        _
      $region10: #{tpu_custom_call.1} parent=5 // pred_check_branch
        %147 = sbr.rel (%p144) target = $region12
      $region11: #{tpu_custom_call.1} parent=5 // pred_region
        %s148 = ssub.s32 %s16, 1
        // Predicated region
        $region13: #{tpu_custom_call.1} parent=11 // pred_check
          %p149 = pneg %p80
        $region14: #{tpu_custom_call.1} parent=11 // pred_check_branch
          %151 = sbr.rel (%p149) target = $region16
        $region15: #{tpu_custom_call.1} parent=11 // pred_region
          %s153 = ssub.s32 256, 256
          %154 = vsyncadd [#allocation6], %s153
          %s155 = smul.addr %s26, 128
          %s156 = scalar_lea.hbm %s1, %s155
          %s157 = sshll.u32 [#allocation5], 4
          %s158 = int_to_ptr.vmem [resolvable:$true] %s157
          %163 = dma.hbm_to_vmem [thread:$0]  %s156, 256, %s158, [#allocation6], 128, 128, 8
        $region16: #{tpu_custom_call.1} parent=11 // pred_fallthru
          _
        // Predicated region
        $region17: #{tpu_custom_call.1} parent=11 // pred_check
          %p164 = pneg %p106
        $region18: #{tpu_custom_call.1} parent=11 // pred_check_branch
          %166 = sbr.rel (%p164) target = $region20
        $region19: #{tpu_custom_call.1} parent=11 // pred_region
          %p167 = scmp.lt.s32.totalorder %s26, 0
          %s168 = scalar_select %p167, %s26, 0
          %s169 = scalar_lea.vmem %s2, %s168
        $region20: #{tpu_custom_call.1} parent=11 // pred_fallthru
          _
      $region12: #{tpu_custom_call.1} parent=5 // pred_fallthru
        _
      %p170 = scmp.lt.s32.totalorder %s16, 2
      // Predicated region
      $region21: #{tpu_custom_call.1} parent=5 // pred_check
        %p171 = pneg %p170
      $region22: #{tpu_custom_call.1} parent=5 // pred_check_branch
        %173 = sbr.rel (%p171) target = $region24
      $region23: #{tpu_custom_call.1} parent=5 // pred_region
        // Predicated region
        $region25: #{tpu_custom_call.1} parent=23 // pred_check
          %p174 = pneg %p48
        $region26: #{tpu_custom_call.1} parent=23 // pred_check_branch
          %176 = sbr.rel (%p174) target = $region28
        $region27: #{tpu_custom_call.1} parent=23 // pred_region
          %s177 = sand.u32 %s38, 1
          %s178 = scalar_lea.sflag [#allocation3], %s177
          %s179 = sand.u32 %s38, 1
          %s180 = smul.addr %s179, 8
          %s181 = scalar_lea.vmem [#allocation2], %s180
          %s183 = ssub.s32 128, 128
          %184 = vsyncadd %s178, %s183
          %s185 = smul.addr %s23, 128
          %s186 = scalar_lea.hbm %s0, %s185
          %s188 = sshll.u32 %s181, 4
          %s189 = int_to_ptr.vmem [resolvable:$true] %s188
          %191 = dma.hbm_to_vmem [thread:$0]  %s186, 128, %s189, %s178
        $region28: #{tpu_custom_call.1} parent=23 // pred_fallthru
          _
      $region24: #{tpu_custom_call.1} parent=5 // pred_fallthru
        _
      %p192 = scmp.le.s32.totalorder 1, %s16
      %p193 = scmp.lt.s32.totalorder %s16, 3
      %p194 = pnand %p192, %p193
      %p195 = pneg %p194
      // Predicated region
      $region29: #{tpu_custom_call.1} parent=5 // pred_check
        _
      $region30: #{tpu_custom_call.1} parent=5 // pred_check_branch
        %197 = sbr.rel (%p194) target = $region32
      $region31: #{tpu_custom_call.1} parent=5 // pred_region
        %s198 = ssub.s32 %s16, 1
        %s199 = sand.u32 %s41, 1
        %s200 = scalar_lea.sflag [#allocation3], %s199
        %s201 = sand.u32 %s41, 1
        %s202 = smul.addr %s201, 8
        %s203 = scalar_lea.vmem [#allocation2], %s202
        // Predicated region
        $region33: #{tpu_custom_call.1} parent=31 // pred_check
          %p204 = pneg %p54
        $region34: #{tpu_custom_call.1} parent=31 // pred_check_branch
          %206 = sbr.rel (%p204) target = $region36
        $region35: #{tpu_custom_call.1} parent=31 // pred_region
          %207 = dma.done %s200, 128
        $region36: #{tpu_custom_call.1} parent=31 // pred_fallthru
          _
        // Predicated region
        $region37: #{tpu_custom_call.1} parent=31 // pred_check
          %p208 = pneg %p80
        $region38: #{tpu_custom_call.1} parent=31 // pred_check_branch
          %210 = sbr.rel (%p208) target = $region40
        $region39: #{tpu_custom_call.1} parent=31 // pred_region
          %211 = dma.done [#allocation6], 256
        $region40: #{tpu_custom_call.1} parent=31 // pred_fallthru
          _
        %s212 = sand.u32 %s41, 1
        %s213 = scalar_lea.sflag [#allocation3], %s212
        %s214 = sand.u32 %s41, 1
        %s215 = smul.addr %s214, 8
        %s216 = scalar_lea.vmem [#allocation2], %s215
        %p217 = pneg %p54
        %p218 = pneg %p51
        %p219 = pneg %p80
        %p220 = pneg %p77
        %p221 = scmp.lt.s32.totalorder %s26, 0
        %s222 = scalar_select %p221, %s26, 0
        %s223 = scalar_lea.vmem %s2, %s222
        %p224 = pneg %p106
        %p225 = pneg %p103
        %p226 = pneg %p134
        %p227 = pneg %p131
        %s228 = sand.u32 %s121, 1
        %s229 = scalar_lea.sflag [#allocation4], %s228
        %s230 = sand.u32 %s121, 1
        %s231 = smul.addr %s230, 8
        %s232 = scalar_lea.vmem [#allocation7], %s231
        %p233 = scmp.lt.s32.totalorder %s26, 0
        %s234 = scalar_select %p233, %s26, 0
        %s235 = scalar_lea.vmem %s2, %s234
        %v236 = vld [vmem:[%s203] sm:$0xff]
        %v237 = vld [vmem:[#allocation5] sm:$0xff]
        %v238 = vld [vmem:[#allocation5 + $0x8] sm:$0xff]
        %v239 = vld [vmem:[%s235] sm:$0x1]
        %v241 = vlaneseq
        %v242 = vshrl.u32 %v241, 7
        %v243 = vsub.s32 0, %v242
        %v244 = vrot.slane %v239, %v243
        %vm246 = vcmask 130048
        %v248 = vsel %vm246, %v236, 0
        %250 = vmatprep.subr.mxu0 0.0
        %251 = vmatpush1.msra.mxu0 %v237
        %252 = vmatprep.subr.mxu0 0.0
        %253 = vmatpush1.msra.mxu0 %v238
        %254 = vmatprep.subr.mxu0 0.0
        %255 = vmatpush1.msra.mxu0 0.0
        %256 = vmatprep.subr.mxu0 0.0
        %257 = vmatpush1.msra.mxu0 0.0
        %258 = vmatprep.subr.mxu0 0.0
        %259 = vmatpush1.msra.mxu0 0.0
        %260 = vmatprep.subr.mxu0 0.0
        %261 = vmatpush1.msra.mxu0 0.0
        %262 = vmatprep.subr.mxu0 0.0
        %263 = vmatpush1.msra.mxu0 0.0
        %264 = vmatprep.subr.mxu0 0.0
        %265 = vmatpush1.msra.mxu0 0.0
        %266 = vmatprep.subr.mxu0 0.0
        %267 = vmatpush1.msra.mxu0 0.0
        %268 = vmatprep.subr.mxu0 0.0
        %269 = vmatpush1.msra.mxu0 0.0
        %270 = vmatprep.subr.mxu0 0.0
        %271 = vmatpush1.msra.mxu0 0.0
        %272 = vmatprep.subr.mxu0 0.0
        %273 = vmatpush1.msra.mxu0 0.0
        %274 = vmatprep.subr.mxu0 0.0
        %275 = vmatpush1.msra.mxu0 0.0
        %276 = vmatprep.subr.mxu0 0.0
        %277 = vmatpush1.msra.mxu0 0.0
        %278 = vmatprep.subr.mxu0 0.0
        %279 = vmatpush1.msra.mxu0 0.0
        %280 = vmatprep.subr.mxu0 0.0
        %281 = vmatpush1.msra.mxu0 0.0
        %282 = vmatprep.subr.mxu0 0.0
        %283 = vmatpush1.msra.mxu0 0.0
        %284 = vmatprep.subr.mxu0 0.0
        %285 = vmatpush1.msra.mxu0 0.0
        %286 = vmatprep.subr.mxu0 0.0
        %287 = vmatpush1.msra.mxu0 0.0
        %288 = vmatprep.subr.mxu0 0.0
        %289 = vmatpush1.msra.mxu0 0.0
        %290 = vmatprep.subr.mxu0 0.0
        %291 = vmatpush1.msra.mxu0 0.0
        %292 = vmatprep.subr.mxu0 0.0
        %293 = vmatpush1.msra.mxu0 0.0
        %294 = vmatprep.subr.mxu0 0.0
        %295 = vmatpush1.msra.mxu0 0.0
        %296 = vmatprep.subr.mxu0 0.0
        %297 = vmatpush1.msra.mxu0 0.0
        %298 = vmatprep.subr.mxu0 0.0
        %299 = vmatpush1.msra.mxu0 0.0
        %300 = vmatprep.subr.mxu0 0.0
        %301 = vmatpush1.msra.mxu0 0.0
        %302 = vmatprep.subr.mxu0 0.0
        %303 = vmatpush1.msra.mxu0 0.0
        %304 = vmatprep.subr.mxu0 0.0
        %305 = vmatpush1.msra.mxu0 0.0
        %306 = vmatprep.subr.mxu0 0.0
        %307 = vmatpush1.msra.mxu0 0.0
        %308 = vmatprep.subr.mxu0 0.0
        %309 = vmatpush1.msra.mxu0 0.0
        %310 = vmatprep.subr.mxu0 0.0
        %311 = vmatpush1.msra.mxu0 0.0
        %312 = vmatprep.subr.mxu0 0.0
        %313 = vmatpush1.msra.mxu0 0.0
        %314 = vmatprep.mubr.f32.mxu0 0.0
        %315 = vmatmul.mubr.f32.gmra.mrb[0].mxu0 %v248
        %v316 = vpop.f32.mrb[0].mxu0
        %v317 = vadd.f32 %v244, %v316
        %v318 = vpop.f32.mrb[0].mxu0
        %319 = vdwg.mxu0
        %v320 = vand.u32 2147483647, %v317
        %vm321 = vcmp.le.f32.partialorder %v320, 0.7853982
        %vm322 = vcmp.lt.s32.totalorder %v317, 0
        %v323 = vand.u32 %v317, 2139095040
        %v324 = vshrl.u32 %v323, 23
        %v325 = vsub.s32 %v324, 127
        %v326 = vand.u32 2147483647, %v317
        %v327 = vand.u32 %v326, 8388607
        %v328 = vor.u32 %v327, 8388608
        %v329 = vsub.s32 0, %v328
        %v330 = vadd.s32 %v325, 1
        %vm331 = vcmp.gt.s32.totalorder %v330, 0
        %v332 = vsel %vm331, %v330, 0
        %v333 = vshrl.u32 %v332, 5
        %v334 = vand.u32 %v332, 31
        %v335 = vsub.s32 32, %v334
        %v336 = vshrl.u32 683565275, %v335
        %v337 = vshll.u32 683565275, %v334
        %v338 = vshrl.u32 2475754826, %v335
        %v339 = vor.u32 %v337, %v338
        %v340 = vshll.u32 2475754826, %v334
        %v341 = vshrl.u32 2131351028, %v335
        %v342 = vor.u32 %v340, %v341
        %v343 = vshll.u32 2131351028, %v334
        %v344 = vshrl.u32 2102212464, %v335
        %v345 = vor.u32 %v343, %v344
        %v346 = vshll.u32 2102212464, %v334
        %v347 = vshrl.u32 920167782, %v335
        %v348 = vor.u32 %v346, %v347
        %v349 = vshll.u32 920167782, %v334
        %v350 = vshrl.u32 1326507024, %v335
        %v351 = vor.u32 %v349, %v350
        %vm352 = vcmp.lt.s32.totalorder %v333, 1
        %vm353 = vcmp.lt.s32.totalorder %v333, 2
        %vm354 = vcmp.lt.s32.totalorder %v333, 3
        %vm355 = vcmp.lt.s32.totalorder %v333, 4
        %v356 = vsel %vm352, %v336, %v339
        %v357 = vsel %vm355, %v345, 2102212464
        %v358 = vsel %vm354, %v342, %v357
        %v359 = vsel %vm353, %v356, %v358
        %v360 = vsel %vm352, %v339, %v342
        %v361 = vsel %vm355, %v348, 920167782
        %v362 = vsel %vm354, %v345, %v361
        %v363 = vsel %vm353, %v360, %v362
        %v364 = vsel %vm352, %v342, %v345
        %v365 = vsel %vm355, %v351, 1326507024
        %v366 = vsel %vm354, %v348, %v365
        %v367 = vsel %vm353, %v364, %v366
        %v368 = vshll.u32 %v328, 8
        %v369 = vmul.u32.u64.compose %v368, %v367
        %v370 = vextract.low.u32 %v369
        %v371 = vextract.high.u32 %v369
        %v372 = vmul.u32.u64.compose %v368, %v363
        %v373 = vextract.low.u32 %v372
        %v374 = vextract.high.u32 %v372
        %v375 = vmul.u32 %v368, %v359
        %v376 = vadd.s32 %v371, %v373
        %vm377 = vc.u32 %v371, %v373
        %v378 = vadd.s32 %v374, 1
        %v379 = vsel %vm377, %v378, %v374
        %v380 = vadd.s32 %v375, %v379
        %v381 = vadd.s32 %v380, 536870912
        %v382 = vshrl.u32 %v381, 30
        %v383 = vshll.u32 %v382, 30
        %v384 = vsub.s32 %v380, %v383
        %vm385 = vcmp.lt.s32.totalorder %v384, 0
        %v386 = vsub.s32 0, %v384
        %v387 = vsel %vm385, %v386, %v384
        %v388 = vclz %v387
        %v389 = vsub.s32 %v388, 2
        %vm390 = vcmp.gt.s32.totalorder 0, %v389
        %v391 = vsel %vm390, 0, %v389
        %v392 = vsub.s32 32, %v391
        %v393 = vshll.u32 %v384, %v391
        %v394 = vshrl.u32 %v376, %v392
        %v395 = vor.u32 %v393, %v394
        %v396 = vsub.s32 4294967266, %v391
        %v397 = vadd.s32 %v396, 127
        %v398 = vshll.u32 %v397, 23
        %v399 = vor.u32 4788187, %v398
        %v400 = vand.u32 2147483647, %v399
        %v402 = vcvt.s32.f32 %v395
        %v403 = vmul.f32 %v402, %v400
        %v404 = vxor.u32 %v403, 2147483648
        %v405 = vsel %vm322, %v404, %v403
        %v406 = vsub.s32 4, %v382
        %v407 = vsel %vm322, %v406, %v382
        %v408 = vsel %vm321, %v317, %v405
        %v409 = vsel %vm321, 0, %v407
        %v410 = vcosq.f32.pop %v408
        %v411 = vsinq.f32.pop %v408
        %vm412 = vweird.f32 %v317
        %v413 = vadd.s32 %v409, 3
        %v414 = vand.u32 %v413, 3
        %vm415 = vcmp.lt.s32.totalorder %v414, 2
        %vm416 = vcmp.eq.s32.totalorder %v414, 0
        %v417 = vxor.u32 %v411, 2147483648
        %v418 = vsel %vm416, %v410, %v417
        %vm419 = vcmp.eq.s32.totalorder %v414, 2
        %v420 = vxor.u32 %v410, 2147483648
        %v421 = vsel %vm419, %v420, %v411
        %v422 = vsel %vm415, %v418, %v421
        %v423 = vsel %vm412, nan, %v422
        %vm424 = vcmask 261120
        %425 = vst.msk [vmem:[%s232] sm:$0xff] %vm424, %v423
        %s426 = sand.u32 %s121, 1
        %s427 = scalar_lea.sflag [#allocation4], %s426
        %s428 = sand.u32 %s121, 1
        %s429 = smul.addr %s428, 8
        %s430 = scalar_lea.vmem [#allocation7], %s429
        // Predicated region
        $region41: #{tpu_custom_call.1} parent=31 // pred_check
          %p431 = pneg %p131
        $region42: #{tpu_custom_call.1} parent=31 // pred_check_branch
          %433 = sbr.rel (%p431) target = $region44
        $region43: #{tpu_custom_call.1} parent=31 // pred_region
          %s435 = ssub.s32 128, 128
          %436 = vsyncadd %s427, %s435
          %s437 = sadd.s32 %s26, %s25
          %s438 = smul.addr %s437, 128
          %s439 = scalar_lea.hbm %s3, %s438
          %s441 = sshll.u32 %s430, 4
          %s442 = int_to_ptr.vmem [resolvable:$true] %s441
          %444 = dma.vmem_to_hbm [thread:$0]  %s442, 128, %s439, %s427
        $region44: #{tpu_custom_call.1} parent=31 // pred_fallthru
          _
      $region32: #{tpu_custom_call.1} parent=5 // pred_fallthru
        _
      %p445 = scmp.le.s32.totalorder 2, %s16
      // Predicated region
      $region45: #{tpu_custom_call.1} parent=5 // pred_check
        %p446 = pneg %p445
      $region46: #{tpu_custom_call.1} parent=5 // pred_check_branch
        %448 = sbr.rel (%p446) target = $region48
      $region47: #{tpu_custom_call.1} parent=5 // pred_region
        %s449 = ssub.s32 %s16, 2
        // Predicated region
        $region49: #{tpu_custom_call.1} parent=47 // pred_check
          %p450 = pneg %p137
        $region50: #{tpu_custom_call.1} parent=47 // pred_check_branch
          %452 = sbr.rel (%p450) target = $region52
        $region51: #{tpu_custom_call.1} parent=47 // pred_region
          %s453 = sand.u32 %s122, 1
          %s454 = scalar_lea.sflag [#allocation4], %s453
          %s455 = sand.u32 %s122, 1
          %s456 = smul.addr %s455, 8
          %s457 = scalar_lea.vmem [#allocation7], %s456
          %458 = dma.done %s454, 128
        $region52: #{tpu_custom_call.1} parent=47 // pred_fallthru
          _
      $region48: #{tpu_custom_call.1} parent=5 // pred_fallthru
        _
    $region6: #{tpu_custom_call.1} parent=1 // loop_footer
      %s20 = sadd.s32 1, %s16
    $region7: #{tpu_custom_call.1} parent=1 // loop_footer_branch
      %15 = sbr.rel target = $region3
    $region8: #{tpu_custom_call.1} parent=1 // loop_exit
      _
    %459 = vsyncpa [#allocation3], 1
    %s460 = scalar_lea.sflag [#allocation3], 1
    %461 = vsyncpa %s460, 1
    %462 = vsyncpa [#allocation6], 1
    %463 = vsyncpa [#allocation4], 1
    %s464 = scalar_lea.sflag [#allocation4], 1
    %465 = vsyncpa %s464, 1

</llo_original>
